<compile_context>
chip_gen: v5e
topology: v5e:2x2
jax: 0.10.0
libtpu: 0.0.40
codegen_flags: <defaults>
</compile_context>

<pallas_src>
import math

import jax
import jax.numpy as jnp
from jax.experimental import pallas as pl
from jax.experimental.pallas import tpu as pltpu


def _gated_nonlinear_kernel(x_ref, m1_ref, b1_ref, m2_ref, b2_ref, o_ref):
    # x_ref : (TM, lane) input tile (native dtype), lane = pack * D.
    # m1_ref: (lane, pack*H)  block-diag * w1      (segment-sum + Linear(1,H))
    # b1_ref: (1, pack*H)     tiled b1
    # m2_ref: (pack*H, lane)  block-diag * w2      (Linear(H,1) + gate broadcast)
    # b2_ref: (1,) in SMEM.
    xf = x_ref[...].astype(jnp.float32)
    x2 = xf * xf
    # Segmented square-sum fused with Linear(1,H): pre[i, s*H+j] = n2[i,s]*w1[j]
    pre = jnp.dot(x2, m1_ref[...], preferred_element_type=jnp.float32)
    h = jnp.maximum(pre + b1_ref[...], 0.0)
    # Linear(H,1) fused with broadcasting the gate logit back to its lanes.
    logit = jnp.dot(h, m2_ref[...], preferred_element_type=jnp.float32)
    logit = logit + b2_ref[0]
    gate = pl.reciprocal(1.0 + jnp.exp(-logit), approx=True)   # sigmoid on EUP
    o_ref[...] = (xf * gate).astype(o_ref.dtype)               # f32 mul, 1 cast


def gated_nonlinear(x, w1, b1, w2, b2, *, tile_m=None,
                    target_block_bytes=1 << 20):
    """x: (..., D).  w1: (H,), b1: (H,), w2: (H,), b2: () -- PyTorch
    Linear(1,H) / Linear(H,1) parameters squeezed to 1-D / scalar."""
    orig_shape = x.shape
    dtype = x.dtype
    D = orig_shape[-1]
    H = w1.shape[0]
    itemsize = jnp.dtype(dtype).itemsize

    x2d = x.reshape(-1, D)
    N = x2d.shape[0]

    # ---- lane-dense packing (default whenever D < 128) -----------------------
    pack, lane = 1, D
    if D < 128:
        l = math.lcm(D, 128)
        p = l // D
        if p <= 32 and l <= 1024:        # keeps M1/M2 & intermediates tiny
            pack, lane = p, l
    # TODO(synk): D<128 shapes that exceed the pack<=32 / lane<=1024 cap (e.g.
    # D=120) fall back to lane-sparse masked stores.

    n_pad = (-N) % pack
    if n_pad:
        x2d = jnp.pad(x2d, ((0, n_pad), (0, 0)))
    rows = (N + n_pad) // pack
    x2d = x2d.reshape(rows, lane)

    # ---- fold the gate MLP into block-diagonal one-hot matmul operands -------
    HH = pack * H
    f32 = jnp.float32
    seg_lane = jnp.arange(lane, dtype=jnp.int32) // D            # lane -> sub-row
    seg_col = jnp.arange(HH, dtype=jnp.int32) // H               # col  -> sub-row
    onehot = (seg_lane[:, None] == seg_col[None, :]).astype(f32)  # (lane, HH)
    w1f = jnp.tile(w1.astype(f32).reshape(-1), pack)              # (HH,)
    w2f = jnp.tile(w2.astype(f32).reshape(-1), pack)              # (HH,)
    m1 = onehot * w1f[None, :]                                    # (lane, HH)
    m2 = onehot.T * w2f[:, None]                                  # (HH, lane)
    b1r = jnp.tile(b1.astype(f32).reshape(-1), pack).reshape(1, HH)
    b2r = jnp.asarray(b2, f32).reshape((1,))

    # ---- tile sizing ----------------------------------------------------------
    sub = {4: 8, 2: 16, 1: 32}.get(itemsize, 8)   # sublane packing per dtype
    if tile_m is None:
        tm = target_block_bytes // max(1, lane * itemsize)
        tm = max(sub, (tm // sub) * sub)
        if rows * lane * itemsize >= (1 << 20):
            # never collapse a large input to grid=(1,): keep >= ~8 steps so DMA
            # pipelines and both v7x TensorCores stream.
            cap = -(-rows // 8)
            cap = max(sub, -(-cap // sub) * sub)
            tm = min(tm, cap)
        tile_m = tm
    tile_m = max(1, min(tile_m, rows))            # ==rows -> full-dim block (legal)
    grid = (pl.cdiv(rows, tile_m),)

    cost = pl.CostEstimate(
        flops=int(rows * lane * (4 * HH + 6)),
        transcendentals=int(rows * lane),
        bytes_accessed=int(2 * rows * lane * itemsize
                           + (2 * lane * HH + HH + 1) * 4),
    )

    out = pl.pallas_call(
        _gated_nonlinear_kernel,
        out_shape=jax.ShapeDtypeStruct((rows, lane), dtype),
        grid=grid,
        in_specs=[
            pl.BlockSpec((tile_m, lane), lambda i: (i, 0)),       # x tile
            pl.BlockSpec((lane, HH), lambda i: (0, 0)),           # M1 (resident)
            pl.BlockSpec((1, HH), lambda i: (0, 0)),              # b1 tiled
            pl.BlockSpec((HH, lane), lambda i: (0, 0)),           # M2 (resident)
            pl.BlockSpec(memory_space=pltpu.MemorySpace.SMEM),    # b2 scalar
        ],
        out_specs=pl.BlockSpec((tile_m, lane), lambda i: (i, 0)),
        compiler_params=pltpu.CompilerParams(
            dimension_semantics=("parallel",),
            vmem_limit_bytes=32 * 1024 * 1024,   # safe on v7x's 64 MiB VMEM
        ),
        cost_estimate=cost,
    )(x2d, m1, b1r, m2, b2r)

    out = out.reshape(rows * pack, D)
    if n_pad:
        out = out[:N]
    return out.reshape(orig_shape)


def gated_nonlinear_ref(x, w1, b1, w2, b2):
    """Pure-JAX reference (mirrors the PyTorch forward)."""
    norms2 = jnp.sum(x * x, axis=-1, keepdims=True)
    h = jnp.maximum(norms2 * w1 + b1, 0.0)
    logit = jnp.sum(h * w2, axis=-1, keepdims=True) + b2
    return x * jax.nn.sigmoid(logit)


if __name__ == "__main__":
    key = jax.random.PRNGKey(0)
    kx1, kx2, kx3, kx4, kx5, k1, k2, k3, k4 = jax.random.split(key, 9)

    hidden = 16
    bound1 = 1.0                   # PyTorch Linear(1,H) init bound
    w1 = jax.random.uniform(k1, (hidden,), minval=-bound1, maxval=bound1)
    b1 = jax.random.uniform(k2, (hidden,), minval=-bound1, maxval=bound1)
    bound2 = hidden ** -0.5        # PyTorch Linear(H,1) init bound
    w2 = jax.random.uniform(k3, (hidden,), minval=-bound2, maxval=bound2)
    b2 = jax.random.uniform(k4, (), minval=-bound2, maxval=bound2)

    def check(x, tol, **kw):
        out = jax.block_until_ready(gated_nonlinear(x, w1, b1, w2, b2, **kw))
        ref = gated_nonlinear_ref(x.astype(jnp.float32), w1, b1, w2, b2)
        assert out.shape == x.shape and out.dtype == x.dtype
        err = jnp.max(jnp.abs(out.astype(jnp.float32) - ref))
        assert jnp.allclose(out.astype(jnp.float32), ref, atol=tol, rtol=tol), \
            f"mismatch, max abs err = {err}"

    # 1) D=32 < 128 -> packed (pack=4, lane=128), single tiny block.
    check(jax.random.normal(kx1, (2, 8, 32), dtype=jnp.float32), 5e-3)
    # 2) row count not divisible by pack -> pad-and-slice, still lane-dense.
    check(jax.random.normal(kx2, (3, 50, 32), dtype=jnp.float32), 5e-3)
    # 3) multi-step grid with a ragged last block (explicit small tile_m).
    check(jax.random.normal(kx3, (4, 100, 16), dtype=jnp.float32), 5e-3,
          tile_m=16)
    # 4) D=48 (128 % D != 0) -> lcm packing: pack=8, lane=384.
    check(jax.random.normal(kx4, (2, 16, 48), dtype=jnp.float32), 5e-3)
    # 5) bf16 input, D>=128 (pack=1): f32 gate math, single cast on store.
    check(jax.random.normal(kx5, (2, 64, 256), dtype=jnp.bfloat16), 3e-2)

    print("KERNEL_OK")
</pallas_src>

<mosaic_0001>
module attributes {stable_mosaic.version = 11 : i64} {
  func.func @_gated_nonlinear_kernel(%arg0: i32, %arg1: memref<4x128xf32, #tpu.memory_space<vmem>>, %arg2: memref<128x64xf32, #tpu.memory_space<vmem>>, %arg3: memref<1x64xf32, #tpu.memory_space<vmem>>, %arg4: memref<64x128xf32, #tpu.memory_space<vmem>>, %arg5: memref<1xf32, #tpu.memory_space<smem>>, %arg6: memref<4x128xf32, #tpu.memory_space<vmem>>) attributes {dimension_semantics = [#tpu.dimension_semantics<parallel>], iteration_bounds = array<i64: 1>, scalar_prefetch = 0 : i64, scratch_operands = 0 : i64, tpu.core_type = #tpu.core_type<tc>, window_params = [{transform_indices = @transform_0, window_bounds = array<i64: 4, 128>}, {pipeline_mode = #tpu.pipeline_mode<synchronous>, transform_indices = @transform_1, window_bounds = array<i64: 128, 64>}, {pipeline_mode = #tpu.pipeline_mode<synchronous>, transform_indices = @transform_2, window_bounds = array<i64: 1, 64>}, {pipeline_mode = #tpu.pipeline_mode<synchronous>, transform_indices = @transform_3, window_bounds = array<i64: 64, 128>}, {transform_indices = @transform_4, window_bounds = array<i64: 1>}, {transform_indices = @transform_5, window_bounds = array<i64: 4, 128>}]} {
    %c0 = arith.constant 0 : index
    %c0_0 = arith.constant 0 : index
    %0 = vector.load %arg1[%c0, %c0_0] : memref<4x128xf32, #tpu.memory_space<vmem>>, vector<4x128xf32>
    %1 = arith.mulf %0, %0 : vector<4x128xf32>
    %c0_1 = arith.constant 0 : index
    %c0_2 = arith.constant 0 : index
    %2 = vector.load %arg2[%c0_1, %c0_2] : memref<128x64xf32, #tpu.memory_space<vmem>>, vector<128x64xf32>
    %cst = arith.constant dense<0.000000e+00> : vector<4x64xf32>
    %3 = tpu.matmul %1, %2, %cst {dimension_numbers = #tpu.dot_dimension_numbers<[1], [0], [0], [1], [0, 0, 1, 1], [], []>} : vector<4x128xf32>, vector<128x64xf32>, vector<4x64xf32> -> vector<4x64xf32>
    %c0_3 = arith.constant 0 : index
    %c0_4 = arith.constant 0 : index
    %4 = vector.load %arg3[%c0_3, %c0_4] : memref<1x64xf32, #tpu.memory_space<vmem>>, vector<1x64xf32>
    %5 = vector.broadcast %4 : vector<1x64xf32> to vector<4x64xf32>
    %6 = arith.addf %3, %5 : vector<4x64xf32>
    %cst_5 = arith.constant 0.000000e+00 : f32
    %7 = vector.broadcast %cst_5 : f32 to vector<4x64xf32>
    %8 = arith.maximumf %6, %7 : vector<4x64xf32>
    %c0_6 = arith.constant 0 : index
    %c0_7 = arith.constant 0 : index
    %9 = vector.load %arg4[%c0_6, %c0_7] : memref<64x128xf32, #tpu.memory_space<vmem>>, vector<64x128xf32>
    %cst_8 = arith.constant dense<0.000000e+00> : vector<4x128xf32>
    %10 = tpu.matmul %8, %9, %cst_8 {dimension_numbers = #tpu.dot_dimension_numbers<[1], [0], [0], [1], [0, 0, 1, 1], [], []>} : vector<4x64xf32>, vector<64x128xf32>, vector<4x128xf32> -> vector<4x128xf32>
    %c0_9 = arith.constant 0 : index
    %11 = memref.load %arg5[%c0_9] : memref<1xf32, #tpu.memory_space<smem>>
    %12 = vector.broadcast %11 : f32 to vector<4x128xf32>
    %13 = arith.addf %10, %12 : vector<4x128xf32>
    %cst_10 = arith.constant 0.000000e+00 : f32
    %14 = vector.broadcast %cst_10 : f32 to vector<4x128xf32>
    %15 = arith.subf %14, %13 : vector<4x128xf32>
    %16 = math.exp %15 : vector<4x128xf32>
    %cst_11 = arith.constant 1.000000e+00 : f32
    %17 = vector.broadcast %cst_11 : f32 to vector<4x128xf32>
    %18 = arith.addf %17, %16 : vector<4x128xf32>
    %19 = tpu.reciprocal %18 {approx = true} : vector<4x128xf32> -> vector<4x128xf32>
    %20 = arith.mulf %0, %19 : vector<4x128xf32>
    %c0_12 = arith.constant 0 : index
    %c0_13 = arith.constant 0 : index
    %21 = vector.load %arg6[%c0_12, %c0_13] : memref<4x128xf32, #tpu.memory_space<vmem>>, vector<4x128xf32>
    tpu.vector_store %arg6[%c0_12, %c0_13], %20 {strides = array<i32>} : memref<4x128xf32, #tpu.memory_space<vmem>>, vector<4x128xf32>,
    return
  }
  func.func @transform_0(%arg0: i32) -> (i32, i32) {
    %c0_i32 = arith.constant 0 : i32
    %c0_i32_0 = arith.constant 0 : i32
    return %arg0, %c0_i32 : i32, i32
  }
  func.func @transform_1(%arg0: i32) -> (i32, i32) {
    %c0_i32 = arith.constant 0 : i32
    %c0_i32_0 = arith.constant 0 : i32
    %c0_i32_1 = arith.constant 0 : i32
    return %c0_i32, %c0_i32_0 : i32, i32
  }
  func.func @transform_2(%arg0: i32) -> (i32, i32) {
    %c0_i32 = arith.constant 0 : i32
    %c0_i32_0 = arith.constant 0 : i32
    %c0_i32_1 = arith.constant 0 : i32
    return %c0_i32, %c0_i32_0 : i32, i32
  }
  func.func @transform_3(%arg0: i32) -> (i32, i32) {
    %c0_i32 = arith.constant 0 : i32
    %c0_i32_0 = arith.constant 0 : i32
    %c0_i32_1 = arith.constant 0 : i32
    return %c0_i32, %c0_i32_0 : i32, i32
  }
  func.func @transform_4(%arg0: i32) -> i32 {
    %c0_i32 = arith.constant 0 : i32
    %c0_i32_0 = arith.constant 0 : i32
    return %c0_i32 : i32
  }
  func.func @transform_5(%arg0: i32) -> (i32, i32) {
    %c0_i32 = arith.constant 0 : i32
    %c0_i32_0 = arith.constant 0 : i32
    return %arg0, %c0_i32 : i32, i32
  }
}

</mosaic_0001>

<llo_original>
// kernel: tpu_custom_call.1
$region0: #{tpu_custom_call.1}
  #allocation0 [shape = 'u32[]', space=smem, size = 0x4, offset = 0x4, fixed_abs, tag = 'smem constant byte address 0x4 - core index']
  #allocation1 [shape = 'u32[72,128]{1,0:T(1,128)}', space=vmem, size = 0x9000, scoped, tag = 'internal scratch']
  #allocation2 [shape = 'f32[1]{0:T(128)S(6)}', space=smem, size = 0x200, scoped, tag = 'scoped memory for tpu_custom_call.1']
  %s0 = inlined_call_operand.vmem [shape: f32[4,128], index: 0, kind: input, shape index: {}]
  %s1 = inlined_call_operand.vmem [shape: f32[128,64], index: 1, kind: input, shape index: {}]
  %s2 = inlined_call_operand.vmem [shape: f32[1,64], index: 2, kind: input, shape index: {}]
  %s3 = inlined_call_operand.vmem [shape: f32[64,128], index: 3, kind: input, shape index: {}]
  %s4 = inlined_call_operand.<no memory space> [shape: f32[1], index: 4, kind: input, shape index: {}]
  %s5 = inlined_call_operand.hbm [shape: f32[4,128], index: 5, kind: output, shape index: {}]
  %s6 = sld [smem:[#allocation0]]
  $region30: #{tpu_custom_call.1} parent=0
    _
  %s8 = ssub.s32 1, %s6
  %s9 = scalar_select 0, %s8, %s6
  %10 = sst [smem:[#allocation2]] %s4
  $region1: #{tpu_custom_call.1} parent=0
    #allocation3 [shape = 'u8[2048]{0}', space=vmem, size = 0x800, scoped, tag = 'output window, operand 0, single buffered']
    #allocation4 [shape = 's32[1]{0}', space=sflag, size = 0x4, scoped, tag = 'scoped memory for tpu_custom_call.1']
    %11 = vsyncpa [#allocation4], 0
    // Predicated region
    $region2: #{tpu_custom_call.1} parent=1 // pred_check
      _
    $region3: #{tpu_custom_call.1} parent=1 // pred_check_branch
      %13 = sbr.rel (0) target = $region5
    $region4: #{tpu_custom_call.1} parent=1 // pred_region
      _
    $region5: #{tpu_custom_call.1} parent=1 // pred_fallthru
      _
    // Predicated region
    $region6: #{tpu_custom_call.1} parent=1 // pred_check
      _
    $region7: #{tpu_custom_call.1} parent=1 // pred_check_branch
      %15 = sbr.rel (0) target = $region9
    $region8: #{tpu_custom_call.1} parent=1 // pred_region
      _
    $region9: #{tpu_custom_call.1} parent=1 // pred_fallthru
      _
    // Predicated region
    $region10: #{tpu_custom_call.1} parent=1 // pred_check
      _
    $region11: #{tpu_custom_call.1} parent=1 // pred_check_branch
      %17 = sbr.rel (0) target = $region13
    $region12: #{tpu_custom_call.1} parent=1 // pred_region
      _
    $region13: #{tpu_custom_call.1} parent=1 // pred_fallthru
      _
    // Predicated region
    $region14: #{tpu_custom_call.1} parent=1 // pred_check
      _
    $region15: #{tpu_custom_call.1} parent=1 // pred_check_branch
      %19 = sbr.rel (0) target = $region17
    $region16: #{tpu_custom_call.1} parent=1 // pred_region
      _
    $region17: #{tpu_custom_call.1} parent=1 // pred_fallthru
      _
    // Predicated region
    $region18: #{tpu_custom_call.1} parent=1 // pred_check
      _
    $region19: #{tpu_custom_call.1} parent=1 // pred_check_branch
      %21 = sbr.rel (0) target = $region21
    $region20: #{tpu_custom_call.1} parent=1 // pred_region
      _
    $region21: #{tpu_custom_call.1} parent=1 // pred_fallthru
      _
    %v22 = vld [vmem:[%s0] sm:$0xf]
    %v23 = vmul.f32 %v22, %v22
    %v24 = vld [vmem:[%s1] sm:$0xff]
    %v25 = vld [vmem:[%s1 + $0x8] sm:$0xff]
    %v26 = vld [vmem:[%s1 + $0x10] sm:$0xff]
    %v27 = vld [vmem:[%s1 + $0x18] sm:$0xff]
    %v28 = vld [vmem:[%s1 + $0x20] sm:$0xff]
    %v29 = vld [vmem:[%s1 + $0x28] sm:$0xff]
    %v30 = vld [vmem:[%s1 + $0x30] sm:$0xff]
    %v31 = vld [vmem:[%s1 + $0x38] sm:$0xff]
    %v32 = vld [vmem:[%s1 + $0x40] sm:$0xff]
    %v33 = vld [vmem:[%s1 + $0x48] sm:$0xff]
    %v34 = vld [vmem:[%s1 + $0x50] sm:$0xff]
    %v35 = vld [vmem:[%s1 + $0x58] sm:$0xff]
    %v36 = vld [vmem:[%s1 + $0x60] sm:$0xff]
    %v37 = vld [vmem:[%s1 + $0x68] sm:$0xff]
    %v38 = vld [vmem:[%s1 + $0x70] sm:$0xff]
    %v39 = vld [vmem:[%s1 + $0x78] sm:$0xff]
    %v40 = vld [vmem:[%s2] sm:$0x1]
    %v42 = vperm.slane %v40, 0
    %44 = vmatpush.msra.mxu0 %v39
    %45 = vmatpush.msra.mxu0 %v38
    %46 = vmatpush.msra.mxu0 %v37
    %47 = vmatpush.msra.mxu0 %v36
    %48 = vmatpush.msra.mxu0 %v35
    %49 = vmatpush.msra.mxu0 %v34
    %50 = vmatpush.msra.mxu0 %v33
    %51 = vmatpush.msra.mxu0 %v32
    %52 = vmatpush.msra.mxu0 %v31
    %53 = vmatpush.msra.mxu0 %v30
    %54 = vmatpush.msra.mxu0 %v29
    %55 = vmatpush.msra.mxu0 %v28
    %56 = vmatpush.msra.mxu0 %v27
    %57 = vmatpush.msra.mxu0 %v26
    %58 = vmatpush.msra.mxu0 %v25
    %59 = vmatpush.msra.mxu0 %v24
    %60 = vmatmul.f32.gmra.mxu0 %v23
    %v61 = vpop.f32.mrf.mxu0
    %v62 = vadd.f32 %v42, %v61
    %63 = vdwg.mxu0
    %v64 = vmax.f32 %v62, 0.0
    %v65 = vld [vmem:[%s3] sm:$0xff]
    %v66 = vld [vmem:[%s3 + $0x8] sm:$0xff]
    %v67 = vld [vmem:[%s3 + $0x10] sm:$0xff]
    %v68 = vld [vmem:[%s3 + $0x18] sm:$0xff]
    %v69 = vld [vmem:[%s3 + $0x20] sm:$0xff]
    %v70 = vld [vmem:[%s3 + $0x28] sm:$0xff]
    %v71 = vld [vmem:[%s3 + $0x30] sm:$0xff]
    %v72 = vld [vmem:[%s3 + $0x38] sm:$0xff]
    %s73 = sld [smem:[#allocation2]]
    %v74 = vstv %s73
    %vm75 = vcmask 523264
    %v77 = vsel %vm75, %v64, 0
    %79 = vmatpush.msra.mxu0 0.0
    %80 = vmatpush.msra.mxu0 0.0
    %81 = vmatpush.msra.mxu0 0.0
    %82 = vmatpush.msra.mxu0 0.0
    %83 = vmatpush.msra.mxu0 0.0
    %84 = vmatpush.msra.mxu0 0.0
    %85 = vmatpush.msra.mxu0 0.0
    %86 = vmatpush.msra.mxu0 0.0
    %87 = vmatpush.msra.mxu0 %v72
    %88 = vmatpush.msra.mxu0 %v71
    %89 = vmatpush.msra.mxu0 %v70
    %90 = vmatpush.msra.mxu0 %v69
    %91 = vmatpush.msra.mxu0 %v68
    %92 = vmatpush.msra.mxu0 %v67
    %93 = vmatpush.msra.mxu0 %v66
    %94 = vmatpush.msra.mxu0 %v65
    %95 = vmatmul.f32.gmra.mxu0 %v77
    %v96 = vpop.f32.mrf.mxu0
    %v97 = vadd.f32 %v74, %v96
    %98 = vdwg.mxu0
    %v99 = vsub.f32 0.0, %v97
    %v100 = vmul.f32 %v99, 1.442695
    %v101 = vpow.pop %v100
    %v102 = vadd.f32 %v101, 1.0
    %v103 = vrcp.pop %v102
    %v104 = vmul.f32 %v22, %v103
    %105 = vst [vmem:[#allocation3] sm:$0xf] %v104
    // Predicated region
    $region22: #{tpu_custom_call.1} parent=1 // pred_check
      _
    $region23: #{tpu_custom_call.1} parent=1 // pred_check_branch
      %107 = sbr.rel (0) target = $region25
    $region24: #{tpu_custom_call.1} parent=1 // pred_region
      %109 = vsyncadd [#allocation4], 0
      %s111 = sshll.u32 [#allocation3], 4
      %s112 = int_to_ptr.vmem [resolvable:$true] %s111
      %s113 = sshll.u32 %s5, 4
      %s114 = int_to_ptr.hbm [resolvable:$true] %s113
      %116 = dma.vmem_to_hbm [thread:$0]  %s112, 64, %s114, [#allocation4]
    $region25: #{tpu_custom_call.1} parent=1 // pred_fallthru
      _
    // Predicated region
    $region26: #{tpu_custom_call.1} parent=1 // pred_check
      _
    $region27: #{tpu_custom_call.1} parent=1 // pred_check_branch
      %118 = sbr.rel (0) target = $region29
    $region28: #{tpu_custom_call.1} parent=1 // pred_region
      %120 = dma.done [#allocation4], 64
    $region29: #{tpu_custom_call.1} parent=1 // pred_fallthru
      _
    %121 = vsyncpa [#allocation4], 1

</llo_original>
